<compile_context>
chip_gen: v7x
topology: tpu7x:2x2x1
jax: 0.10.0
libtpu: 0.0.40
codegen_flags: <defaults>
</compile_context>

<pallas_src>
import functools
import math

import jax
import jax.numpy as jnp
from jax.experimental import pallas as pl
from jax.experimental.pallas import tpu as pltpu

_LANE = 128


def _sublane_for(dtype) -> int:
    """Sublane packing for the dtype: 8 (f32), 16 (bf16/f16), 32 (int8/fp8)."""
    return max(8, 32 // jnp.dtype(dtype).itemsize)


def _round_up(n, m):
    return ((n + m - 1) // m) * m


# ---------------------------------------------------------------------------
# Large-feature path: per-(sample, feature-tile) grid, perm gather via index_map
# ---------------------------------------------------------------------------
def _mixup_large_kernel(n_ftiles, perm_ref, coef_ref, x_ref, xp_ref, o_ref):
    # perm_ref / coef_ref are scalar-prefetched SMEM refs.
    i = pl.program_id(0) // n_ftiles                  # sample index
    c = coef_ref[i]                                   # f32 scalar
    xf = x_ref[...].astype(jnp.float32)
    xpf = xp_ref[...].astype(jnp.float32)
    o_ref[...] = (c * xf + (1.0 - c) * xpf).astype(o_ref.dtype)


def _mixup_large(x3, perm, coeffs, tile_rows, vmem_limit_bytes):
    bs, rows, _ = x3.shape
    itemsize = jnp.dtype(x3.dtype).itemsize
    n_ftiles = pl.cdiv(rows, tile_rows)               # last tile may be ragged
    blk = (1, tile_rows, _LANE)

    x_spec = pl.BlockSpec(blk, lambda g, p, c: (g // n_ftiles, g % n_ftiles, 0))
    xp_spec = pl.BlockSpec(blk, lambda g, p, c: (p[g // n_ftiles], g % n_ftiles, 0))
    o_spec = pl.BlockSpec(blk, lambda g, p, c: (g // n_ftiles, g % n_ftiles, 0))

    total = bs * rows * _LANE
    cost = pl.CostEstimate(flops=3 * total, transcendentals=0,
                           bytes_accessed=3 * total * itemsize)

    return pl.pallas_call(
        functools.partial(_mixup_large_kernel, n_ftiles),
        out_shape=jax.ShapeDtypeStruct((bs, rows, _LANE), x3.dtype),
        grid_spec=pltpu.PrefetchScalarGridSpec(
            num_scalar_prefetch=2,                    # perm, coeffs -> SMEM
            grid=(bs * n_ftiles,),                    # single balanced axis
            in_specs=[x_spec, xp_spec],
            out_specs=o_spec,
        ),
        compiler_params=pltpu.CompilerParams(
            dimension_semantics=("parallel",),
            vmem_limit_bytes=vmem_limit_bytes),
        cost_estimate=cost,
    )(perm, coeffs, x3, x3)


# ---------------------------------------------------------------------------
# Small-feature path: many samples per grid step, X[perm] pre-gathered in XLA
# ---------------------------------------------------------------------------
def _mixup_small_kernel(x_ref, xp_ref, c_ref, o_ref):
    c = c_ref[...]                                    # (TB, 1, LANE) f32
    xf = x_ref[...].astype(jnp.float32)
    xpf = xp_ref[...].astype(jnp.float32)
    o_ref[...] = (c * xf + (1.0 - c) * xpf).astype(o_ref.dtype)


def _mixup_small(x3, perm, coeffs, samples_per_tile, vmem_limit_bytes):
    bs, rows, _ = x3.shape
    itemsize = jnp.dtype(x3.dtype).itemsize
    tb = samples_per_tile

    xp3 = jnp.take(x3, perm, axis=0)                  # one extra (cheap) pass
    c_lane = jnp.broadcast_to(
        coeffs.astype(jnp.float32).reshape(bs, 1, 1), (bs, 1, _LANE))

    blk = (tb, rows, _LANE)
    grid = (pl.cdiv(bs, tb),)                         # last block may be ragged

    total = bs * rows * _LANE
    cost = pl.CostEstimate(flops=3 * total, transcendentals=0,
                           bytes_accessed=3 * total * itemsize)

    return pl.pallas_call(
        _mixup_small_kernel,
        out_shape=jax.ShapeDtypeStruct((bs, rows, _LANE), x3.dtype),
        grid=grid,
        in_specs=[pl.BlockSpec(blk, lambda i: (i, 0, 0)),
                  pl.BlockSpec(blk, lambda i: (i, 0, 0)),
                  pl.BlockSpec((tb, 1, _LANE), lambda i: (i, 0, 0))],
        out_specs=pl.BlockSpec(blk, lambda i: (i, 0, 0)),
        compiler_params=pltpu.CompilerParams(
            dimension_semantics=("parallel",),
            vmem_limit_bytes=vmem_limit_bytes),
        cost_estimate=cost,
    )(x3, xp3, c_lane)


# ---------------------------------------------------------------------------
# Dispatcher
# ---------------------------------------------------------------------------
def mixup_x_pallas(x, perm, coeffs, *,
                   max_tile_bytes=4 << 20,            # per-buffer VMEM target
                   small_sample_bytes=128 << 10):     # small-path threshold
    """Mix x (any rank >= 2, batch-major): c[i]*x[i] + (1-c[i])*x[perm[i]]."""
    bs = x.shape[0]
    orig_shape = x.shape
    dtype = x.dtype
    itemsize = jnp.dtype(dtype).itemsize
    f = int(math.prod(orig_shape[1:]))
    sublane = _sublane_for(dtype)

    rows = pl.cdiv(f, _LANE)                          # 128-lane rows / sample
    padded_f = rows * _LANE

    x_flat = x.reshape(bs, f)
    if padded_f != f:
        # Lane alignment only: pads < 128 elements per sample.  (The pad /
        # un-slice passes exist only in this rare unaligned case.)
        x_flat = jnp.pad(x_flat, ((0, 0), (0, padded_f - f)))
    x3 = x_flat.reshape(bs, rows, _LANE)

    perm = perm.astype(jnp.int32)
    coeffs = coeffs.astype(jnp.float32)

    sample_bytes = rows * _LANE * itemsize
    max_rows_per_tile = max(
        sublane, (max_tile_bytes // (_LANE * itemsize)) // sublane * sublane)

    if sample_bytes <= small_sample_bytes and rows <= max_rows_per_tile:
        # -------- small-feature path: multiple samples per step -----------
        tb = max(1, min(bs, max_tile_bytes // sample_bytes))
        if bs > 1:
            tb = min(tb, pl.cdiv(bs, 2))   # >= 2 steps -> both v7x TCs busy
        tile_bytes = tb * sample_bytes
        vmem_limit = min(56 << 20, max(32 << 20, 6 * tile_bytes + (8 << 20)))
        out = _mixup_small(x3, perm, coeffs, tb, vmem_limit)
    else:
        # -------- large-feature path: per-sample perm gather ---------------
        n_ftiles = pl.cdiv(rows, max_rows_per_tile)
        if n_ftiles == 1:
            tile_rows = rows                # block == full feature dim (legal)
        else:
            tile_rows = min(
                _round_up(pl.cdiv(rows, n_ftiles), sublane),
                (rows // sublane) * sublane)
        tile_bytes = tile_rows * _LANE * itemsize
        vmem_limit = min(56 << 20, max(32 << 20, 6 * tile_bytes + (8 << 20)))
        out = _mixup_large(x3, perm, coeffs, tile_rows, vmem_limit)

    if padded_f != f:
        out = out.reshape(bs, padded_f)[:, :f]
    return out.reshape(orig_shape)


def mix_labels(y, perm, coeffs, mixadd):
    """Label mixing in plain JAX (data volume is negligible)."""
    if mixadd:
        return jnp.clip(y + y[perm], 0, 1)
    if y.ndim == 1:
        return coeffs * y + (1.0 - coeffs) * y[perm]
    c = coeffs.reshape((-1,) + (1,) * (y.ndim - 1))
    return c * y + (1.0 - c) * y[perm]


class MixupPallas:
    """JAX/Pallas port of the PyTorch `Mixup` module."""

    def __init__(self, mix_beta, mixadd=False):
        self.mix_beta = float(mix_beta)
        self.mixadd = bool(mixadd)

    def __call__(self, key, X, Y, Y2=None):
        bs = X.shape[0]
        kp, kc = jax.random.split(key)
        perm = jax.random.permutation(kp, bs)                        # randperm
        coeffs = jax.random.beta(kc, self.mix_beta, self.mix_beta, (bs,))

        Xo = mixup_x_pallas(X, perm, coeffs)
        Yo = mix_labels(Y, perm, coeffs, self.mixadd)
        if Y2 is not None:
            Y2o = mix_labels(Y2, perm, coeffs, self.mixadd)
            return Xo, Yo, Y2o
        return Xo, Yo


if __name__ == "__main__":
    key = jax.random.PRNGKey(0)
    kx, ky, ky2, kmix = jax.random.split(key, 4)

    B, C, H, W = 2, 4, 16, 16
    NC = 6
    X = jax.random.normal(kx, (B, C, H, W), dtype=jnp.float32)
    Y = jax.random.uniform(ky, (B, NC), dtype=jnp.float32)
    Y2 = jax.random.uniform(ky2, (B, NC), dtype=jnp.float32)

    mixer = MixupPallas(mix_beta=1.0, mixadd=False)
    Xo, Yo, Y2o = mixer(kmix, X, Y, Y2)
    jax.block_until_ready((Xo, Yo, Y2o))

    # Pure-JAX reference with the same perm / coeffs draw.
    kp, kc = jax.random.split(kmix)
    perm = jax.random.permutation(kp, B)
    coeffs = jax.random.beta(kc, 1.0, 1.0, (B,))
    c4 = coeffs[:, None, None, None]
    c2 = coeffs[:, None]
    ref_X = c4 * X + (1.0 - c4) * X[perm]
    ref_Y = c2 * Y + (1.0 - c2) * Y[perm]
    ref_Y2 = c2 * Y2 + (1.0 - c2) * Y2[perm]

    assert Xo.dtype == X.dtype and Xo.shape == X.shape
    assert jnp.allclose(Xo, ref_X, atol=1e-5, rtol=1e-5)
    assert jnp.allclose(Yo, ref_Y, atol=1e-5, rtol=1e-5)
    assert jnp.allclose(Y2o, ref_Y2, atol=1e-5, rtol=1e-5)

    # bf16 path: HBM streams stay bf16 (math in f32 inside the kernel).
    Xb = X.astype(jnp.bfloat16)
    Xbo, _ = MixupPallas(mix_beta=1.0, mixadd=False)(kmix, Xb, Y)
    jax.block_until_ready(Xbo)
    assert Xbo.dtype == jnp.bfloat16
    Xbf = Xb.astype(jnp.float32)
    refb = c4 * Xbf + (1.0 - c4) * Xbf[perm]
    assert jnp.allclose(Xbo.astype(jnp.float32), refb, atol=2e-2, rtol=2e-2)

    # mixadd=True label path.
    Ya = (Y > 0.5).astype(jnp.float32)
    _, Yao = MixupPallas(mix_beta=1.0, mixadd=True)(kmix, X, Ya)
    jax.block_until_ready(Yao)
    assert jnp.allclose(Yao, jnp.clip(Ya + Ya[perm], 0.0, 1.0))

    # ---- direct-kernel coverage of the review's correctness concerns -------
    def ref_mix(x, p, c):
        cc = c.reshape((-1,) + (1,) * (x.ndim - 1)).astype(jnp.float32)
        xf = x.astype(jnp.float32)
        return cc * xf + (1.0 - cc) * xf[p]

    # (a) large path: f not a multiple of 128, multiple feature tiles with a
    #     ragged last tile, lane padding (< 128 elems / sample).
    k1, k2, k3 = jax.random.split(jax.random.PRNGKey(1), 3)
    Xu = jax.random.normal(k1, (3, 5, 7, 37), dtype=jnp.float32)   # f = 1295
    pu = jax.random.permutation(k2, 3)
    cu = jax.random.beta(k3, 1.0, 1.0, (3,))
    Xu_o = mixup_x_pallas(Xu, pu, cu,
                          max_tile_bytes=8 * 128 * 4,       # 8-row f32 tiles
                          small_sample_bytes=0)             # force large path
    jax.block_until_ready(Xu_o)
    assert jnp.allclose(Xu_o, ref_mix(Xu, pu, cu), atol=1e-5, rtol=1e-5)

    # (b) large path, bf16 (sublane packing 16), ragged last feature tile.
    Xub = jax.random.normal(k1, (2, 33, 130), dtype=jnp.bfloat16)  # f = 4290
    pub = jnp.array([1, 0], dtype=jnp.int32)
    cub = jnp.array([0.25, 0.75], dtype=jnp.float32)
    Xub_o = mixup_x_pallas(Xub, pub, cub,
                           max_tile_bytes=16 * 128 * 2,     # 16-row bf16 tiles
                           small_sample_bytes=0)
    jax.block_until_ready(Xub_o)
    assert Xub_o.dtype == jnp.bfloat16
    assert jnp.allclose(Xub_o.astype(jnp.float32), ref_mix(Xub, pub, cub),
                        atol=2e-2, rtol=2e-2)

    # (c) small path with an odd batch (partial batch block, masked writes).
    Xs = jax.random.normal(k2, (3, 4, 16, 16), dtype=jnp.float32)
    ps = jnp.array([2, 0, 1], dtype=jnp.int32)
    cs = jnp.array([0.1, 0.6, 0.9], dtype=jnp.float32)
    Xs_o = mixup_x_pallas(Xs, ps, cs)
    jax.block_until_ready(Xs_o)
    assert jnp.allclose(Xs_o, ref_mix(Xs, ps, cs), atol=1e-5, rtol=1e-5)

    print("KERNEL_OK")
</pallas_src>

<mosaic_0001>
module attributes {stable_mosaic.version = 11 : i64} {
  func.func @_mixup_small_kernel(%arg0: i32, %arg1: memref<1x8x128xf32, #tpu.memory_space<vmem>>, %arg2: memref<1x8x128xf32, #tpu.memory_space<vmem>>, %arg3: memref<1x1x128xf32, #tpu.memory_space<vmem>>, %arg4: memref<1x8x128xf32, #tpu.memory_space<vmem>>) attributes {dimension_semantics = [#tpu.dimension_semantics<parallel>], iteration_bounds = array<i64: 2>, scalar_prefetch = 0 : i64, scratch_operands = 0 : i64, tpu.core_type = #tpu.core_type<tc>, window_params = [{transform_indices = @transform_0, window_bounds = array<i64: 1, 8, 128>}, {transform_indices = @transform_1, window_bounds = array<i64: 1, 8, 128>}, {transform_indices = @transform_2, window_bounds = array<i64: 1, 1, 128>}, {transform_indices = @transform_3, window_bounds = array<i64: 1, 8, 128>}]} {
    %c0 = arith.constant 0 : index
    %c0_0 = arith.constant 0 : index
    %c0_1 = arith.constant 0 : index
    %0 = vector.load %arg3[%c0, %c0_0, %c0_1] : memref<1x1x128xf32, #tpu.memory_space<vmem>>, vector<1x1x128xf32>
    %c0_2 = arith.constant 0 : index
    %c0_3 = arith.constant 0 : index
    %c0_4 = arith.constant 0 : index
    %1 = vector.load %arg1[%c0_2, %c0_3, %c0_4] : memref<1x8x128xf32, #tpu.memory_space<vmem>>, vector<1x8x128xf32>
    %c0_5 = arith.constant 0 : index
    %c0_6 = arith.constant 0 : index
    %c0_7 = arith.constant 0 : index
    %2 = vector.load %arg2[%c0_5, %c0_6, %c0_7] : memref<1x8x128xf32, #tpu.memory_space<vmem>>, vector<1x8x128xf32>
    %3 = vector.broadcast %0 : vector<1x1x128xf32> to vector<1x8x128xf32>
    %4 = arith.mulf %3, %1 : vector<1x8x128xf32>
    %cst = arith.constant 1.000000e+00 : f32
    %5 = vector.broadcast %cst : f32 to vector<1x1x128xf32>
    %6 = arith.subf %5, %0 : vector<1x1x128xf32>
    %7 = vector.broadcast %6 : vector<1x1x128xf32> to vector<1x8x128xf32>
    %8 = arith.mulf %7, %2 : vector<1x8x128xf32>
    %9 = arith.addf %4, %8 : vector<1x8x128xf32>
    %c0_8 = arith.constant 0 : index
    %c0_9 = arith.constant 0 : index
    %c0_10 = arith.constant 0 : index
    %10 = vector.load %arg4[%c0_8, %c0_9, %c0_10] : memref<1x8x128xf32, #tpu.memory_space<vmem>>, vector<1x8x128xf32>
    tpu.vector_store %arg4[%c0_8, %c0_9, %c0_10], %9 {strides = array<i32>} : memref<1x8x128xf32, #tpu.memory_space<vmem>>, vector<1x8x128xf32>,
    return
  }
  func.func @transform_0(%arg0: i32) -> (i32, i32, i32) {
    %c0_i32 = arith.constant 0 : i32
    %c0_i32_0 = arith.constant 0 : i32
    %c0_i32_1 = arith.constant 0 : i32
    return %arg0, %c0_i32, %c0_i32_0 : i32, i32, i32
  }
  func.func @transform_1(%arg0: i32) -> (i32, i32, i32) {
    %c0_i32 = arith.constant 0 : i32
    %c0_i32_0 = arith.constant 0 : i32
    %c0_i32_1 = arith.constant 0 : i32
    return %arg0, %c0_i32, %c0_i32_0 : i32, i32, i32
  }
  func.func @transform_2(%arg0: i32) -> (i32, i32, i32) {
    %c0_i32 = arith.constant 0 : i32
    %c0_i32_0 = arith.constant 0 : i32
    %c0_i32_1 = arith.constant 0 : i32
    return %arg0, %c0_i32, %c0_i32_0 : i32, i32, i32
  }
  func.func @transform_3(%arg0: i32) -> (i32, i32, i32) {
    %c0_i32 = arith.constant 0 : i32
    %c0_i32_0 = arith.constant 0 : i32
    %c0_i32_1 = arith.constant 0 : i32
    return %arg0, %c0_i32, %c0_i32_0 : i32, i32, i32
  }
}

</mosaic_0001>

<llo_original>
// kernel: tpu_custom_call.1
$region0: #{tpu_custom_call.1}
  #allocation0 [shape = 'u32[]', space=smem, size = 0x4, offset = 0x4, fixed_abs, tag = 'smem constant byte address 0x4 - core index']
  #allocation1 [shape = 'u32[144,128]{1,0:T(1,128)}', space=vmem, size = 0x12000, scoped, tag = 'internal scratch']
  %s0 = inlined_call_operand.hbm [shape: f32[2,8,128], index: 0, kind: input, shape index: {}]
  %s1 = inlined_call_operand.hbm [shape: f32[2,8,128], index: 1, kind: input, shape index: {}]
  %s2 = inlined_call_operand.vmem [shape: f32[2,1,128], index: 2, kind: input, shape index: {}]
  %s3 = inlined_call_operand.hbm [shape: f32[2,8,128], index: 3, kind: output, shape index: {}]
  %s4 = sld [smem:[#allocation0]]
  $region53: #{tpu_custom_call.1} parent=0
    _
  %s6 = ssub.s32 1, %s4
  %s7 = scalar_select 0, %s6, %s4
  $region1: #{tpu_custom_call.1} parent=0
    #allocation2 [shape = 'u8[8192]{0}', space=vmem, size = 0x2000, scoped, tag = 'input window, operand 0']
    #allocation3 [shape = 's32[2]{0}', space=sflag, size = 0x8, scoped, tag = 'scoped memory for tpu_custom_call.1']
    #allocation4 [shape = 's32[2]{0}', space=sflag, size = 0x8, scoped, tag = 'scoped memory for tpu_custom_call.1']
    #allocation5 [shape = 'u8[8192]{0}', space=vmem, size = 0x2000, scoped, tag = 'input window, operand 1']
    #allocation6 [shape = 's32[2]{0}', space=sflag, size = 0x8, scoped, tag = 'scoped memory for tpu_custom_call.1']
    #allocation7 [shape = 'u8[8192]{0}', space=vmem, size = 0x2000, scoped, tag = 'output window, operand 0']
    %8 = vsyncpa [#allocation3], 0
    %s9 = scalar_lea.sflag [#allocation3], 1
    %10 = vsyncpa %s9, 0
    %11 = vsyncpa [#allocation6], 0
    %s12 = scalar_lea.sflag [#allocation6], 1
    %13 = vsyncpa %s12, 0
    %14 = vsyncpa [#allocation4], 0
    %s15 = scalar_lea.sflag [#allocation4], 1
    %16 = vsyncpa %s15, 0
    loop: start=0, step=1, limit=4
    $region2: #{tpu_custom_call.1} parent=1 // loop_pre_header
      _
    $region3: #{tpu_custom_call.1} parent=1 // loop_header
      %s18 = sphi 0, %s22
      %p19 = scmp.ge.s32.totalorder %s18, 4
      %s28 = sphi 0, %s30
      %s31 = sphi 0, %s28
      %s32 = sphi 0, %s31
      %s48 = sphi 0, %s32
      %s54 = sphi 0, %s56
      %s57 = sphi 0, %s54
      %s58 = sphi 0, %s57
      %s74 = sphi 0, %s58
      %s80 = sphi 0, %s82
      %s83 = sphi 0, %s80
      %s84 = sphi 0, %s83
      %s100 = sphi 0, %s84
      %s106 = sphi 0, %s108
      %s109 = sphi 0, %s106
      %s110 = sphi 0, %s109
      %s126 = sphi 0, %s110
    $region4: #{tpu_custom_call.1} parent=1 // loop_header_branch
      %21 = sbr.rel (%p19) target = $region8
    $region5: #{tpu_custom_call.1} parent=1 // loop_body
      %s23 = ssub.s32 %s18, 1
      %s24 = ssub.s32 %s18, 2
      %s25 = sadd.s32 %s18, 1
      %s26 = ssub.s32 %s18, %s25
      %p27 = scmp.eq.s32.totalorder %s26, 0
      %s29 = sadd.s32 %s28, 1
      %s30 = scalar_select %p27, %s28, %s29
      %p33 = pneg %p27
      %p34 = scmp.eq.s32.totalorder %s18, 1
      %p35 = por %p33, %p34
      %p36 = scmp.ne.s32.totalorder %s28, %s31
      %p37 = scmp.eq.s32.totalorder %s18, 0
      %p38 = por %p36, %p37
      %p39 = scmp.ne.s32.totalorder %s28, %s31
      %p40 = scmp.eq.s32.totalorder %s23, 1
      %p41 = por %p39, %p40
      %p42 = scmp.ne.s32.totalorder %s31, %s32
      %p43 = scmp.eq.s32.totalorder %s23, 0
      %p44 = por %p42, %p43
      %p45 = scmp.ne.s32.totalorder %s31, %s32
      %p46 = scmp.eq.s32.totalorder %s24, 1
      %p47 = por %p45, %p46
      %p49 = scmp.ne.s32.totalorder %s32, %s48
      %p50 = scmp.eq.s32.totalorder %s24, 0
      %p51 = por %p49, %p50
      %s52 = ssub.s32 %s18, %s25
      %p53 = scmp.eq.s32.totalorder %s52, 0
      %s55 = sadd.s32 %s54, 1
      %s56 = scalar_select %p53, %s54, %s55
      %p59 = pneg %p53
      %p60 = scmp.eq.s32.totalorder %s18, 1
      %p61 = por %p59, %p60
      %p62 = scmp.ne.s32.totalorder %s54, %s57
      %p63 = scmp.eq.s32.totalorder %s18, 0
      %p64 = por %p62, %p63
      %p65 = scmp.ne.s32.totalorder %s54, %s57
      %p66 = scmp.eq.s32.totalorder %s23, 1
      %p67 = por %p65, %p66
      %p68 = scmp.ne.s32.totalorder %s57, %s58
      %p69 = scmp.eq.s32.totalorder %s23, 0
      %p70 = por %p68, %p69
      %p71 = scmp.ne.s32.totalorder %s57, %s58
      %p72 = scmp.eq.s32.totalorder %s24, 1
      %p73 = por %p71, %p72
      %p75 = scmp.ne.s32.totalorder %s58, %s74
      %p76 = scmp.eq.s32.totalorder %s24, 0
      %p77 = por %p75, %p76
      %s78 = ssub.s32 %s18, %s25
      %p79 = scmp.eq.s32.totalorder %s78, 0
      %s81 = sadd.s32 %s80, 1
      %s82 = scalar_select %p79, %s80, %s81
      %p85 = pneg %p79
      %p86 = scmp.eq.s32.totalorder %s18, 1
      %p87 = por %p85, %p86
      %p88 = scmp.ne.s32.totalorder %s80, %s83
      %p89 = scmp.eq.s32.totalorder %s18, 0
      %p90 = por %p88, %p89
      %p91 = scmp.ne.s32.totalorder %s80, %s83
      %p92 = scmp.eq.s32.totalorder %s23, 1
      %p93 = por %p91, %p92
      %p94 = scmp.ne.s32.totalorder %s83, %s84
      %p95 = scmp.eq.s32.totalorder %s23, 0
      %p96 = por %p94, %p95
      %p97 = scmp.ne.s32.totalorder %s83, %s84
      %p98 = scmp.eq.s32.totalorder %s24, 1
      %p99 = por %p97, %p98
      %p101 = scmp.ne.s32.totalorder %s84, %s100
      %p102 = scmp.eq.s32.totalorder %s24, 0
      %p103 = por %p101, %p102
      %s104 = ssub.s32 %s18, %s25
      %p105 = scmp.eq.s32.totalorder %s104, 0
      %s107 = sadd.s32 %s106, 1
      %s108 = scalar_select %p105, %s106, %s107
      %p111 = pneg %p105
      %p112 = scmp.eq.s32.totalorder %s18, 1
      %p113 = por %p111, %p112
      %p114 = scmp.ne.s32.totalorder %s106, %s109
      %p115 = scmp.eq.s32.totalorder %s18, 0
      %p116 = por %p114, %p115
      %p117 = scmp.ne.s32.totalorder %s106, %s109
      %p118 = scmp.eq.s32.totalorder %s23, 1
      %p119 = por %p117, %p118
      %p120 = scmp.ne.s32.totalorder %s109, %s110
      %p121 = scmp.eq.s32.totalorder %s23, 0
      %p122 = por %p120, %p121
      %p123 = scmp.ne.s32.totalorder %s109, %s110
      %p124 = scmp.eq.s32.totalorder %s24, 1
      %p125 = por %p123, %p124
      %p127 = scmp.ne.s32.totalorder %s110, %s126
      %p128 = scmp.eq.s32.totalorder %s24, 0
      %p129 = por %p127, %p128
      %p130 = scmp.le.s32.totalorder 1, %s18
      %p131 = scmp.lt.s32.totalorder %s18, 3
      %p132 = pnand %p130, %p131
      %p133 = pneg %p132
      // Predicated region
      $region9: #{tpu_custom_call.1} parent=5 // pred_check
        _
      $region10: #{tpu_custom_call.1} parent=5 // pred_check_branch
        %135 = sbr.rel (%p132) target = $region12
      $region11: #{tpu_custom_call.1} parent=5 // pred_region
        %s136 = ssub.s32 %s18, 1
      $region12: #{tpu_custom_call.1} parent=5 // pred_fallthru
        _
      %p137 = scmp.lt.s32.totalorder %s18, 2
      // Predicated region
      $region13: #{tpu_custom_call.1} parent=5 // pred_check
        %p138 = pneg %p137
      $region14: #{tpu_custom_call.1} parent=5 // pred_check_branch
        %140 = sbr.rel (%p138) target = $region16
      $region15: #{tpu_custom_call.1} parent=5 // pred_region
        // Predicated region
        $region17: #{tpu_custom_call.1} parent=15 // pred_check
          %p141 = pneg %p38
        $region18: #{tpu_custom_call.1} parent=15 // pred_check_branch
          %143 = sbr.rel (%p141) target = $region20
        $region19: #{tpu_custom_call.1} parent=15 // pred_region
          %s144 = sand.u32 %s28, 1
          %s145 = scalar_lea.sflag [#allocation3], %s144
          %s146 = sand.u32 %s28, 1
          %s147 = smul.addr %s146, 8
          %s148 = scalar_lea.vmem [#allocation2], %s147
          %s150 = ssub.s32 128, 128
          %151 = vsyncadd %s145, %s150
          %s152 = smul.addr %s18, 128
          %s153 = scalar_lea.hbm %s0, %s152
          %s155 = sshll.u32 %s148, 4
          %s156 = int_to_ptr.vmem [resolvable:$true] %s155
          %158 = dma.hbm_to_vmem [thread:$0]  %s153, 128, %s156, %s145
        $region20: #{tpu_custom_call.1} parent=15 // pred_fallthru
          _
        // Predicated region
        $region21: #{tpu_custom_call.1} parent=15 // pred_check
          %p159 = pneg %p64
        $region22: #{tpu_custom_call.1} parent=15 // pred_check_branch
          %161 = sbr.rel (%p159) target = $region24
        $region23: #{tpu_custom_call.1} parent=15 // pred_region
          %s162 = sand.u32 %s54, 1
          %s163 = scalar_lea.sflag [#allocation6], %s162
          %s164 = sand.u32 %s54, 1
          %s165 = smul.addr %s164, 8
          %s166 = scalar_lea.vmem [#allocation5], %s165
          %s168 = ssub.s32 128, 128
          %169 = vsyncadd %s163, %s168
          %s170 = smul.addr %s18, 128
          %s171 = scalar_lea.hbm %s1, %s170
          %s173 = sshll.u32 %s166, 4
          %s174 = int_to_ptr.vmem [resolvable:$true] %s173
          %176 = dma.hbm_to_vmem [thread:$0]  %s171, 128, %s174, %s163
        $region24: #{tpu_custom_call.1} parent=15 // pred_fallthru
          _
        // Predicated region
        $region25: #{tpu_custom_call.1} parent=15 // pred_check
          %p177 = pneg %p90
        $region26: #{tpu_custom_call.1} parent=15 // pred_check_branch
          %179 = sbr.rel (%p177) target = $region28
        $region27: #{tpu_custom_call.1} parent=15 // pred_region
          %p180 = scmp.lt.s32.totalorder %s18, 1
          %s181 = scalar_select %p180, %s18, 1
          %s182 = scalar_lea.vmem %s2, %s181
        $region28: #{tpu_custom_call.1} parent=15 // pred_fallthru
          _
      $region16: #{tpu_custom_call.1} parent=5 // pred_fallthru
        _
      %p183 = scmp.le.s32.totalorder 1, %s18
      %p184 = scmp.lt.s32.totalorder %s18, 3
      %p185 = pnand %p183, %p184
      %p186 = pneg %p185
      // Predicated region
      $region29: #{tpu_custom_call.1} parent=5 // pred_check
        _
      $region30: #{tpu_custom_call.1} parent=5 // pred_check_branch
        %188 = sbr.rel (%p185) target = $region32
      $region31: #{tpu_custom_call.1} parent=5 // pred_region
        %s189 = ssub.s32 %s18, 1
        %s190 = sand.u32 %s31, 1
        %s191 = scalar_lea.sflag [#allocation3], %s190
        %s192 = sand.u32 %s31, 1
        %s193 = smul.addr %s192, 8
        %s194 = scalar_lea.vmem [#allocation2], %s193
        // Predicated region
        $region33: #{tpu_custom_call.1} parent=31 // pred_check
          %p195 = pneg %p44
        $region34: #{tpu_custom_call.1} parent=31 // pred_check_branch
          %197 = sbr.rel (%p195) target = $region36
        $region35: #{tpu_custom_call.1} parent=31 // pred_region
          %198 = dma.done %s191, 128
        $region36: #{tpu_custom_call.1} parent=31 // pred_fallthru
          _
        %s199 = sand.u32 %s57, 1
        %s200 = scalar_lea.sflag [#allocation6], %s199
        %s201 = sand.u32 %s57, 1
        %s202 = smul.addr %s201, 8
        %s203 = scalar_lea.vmem [#allocation5], %s202
        // Predicated region
        $region37: #{tpu_custom_call.1} parent=31 // pred_check
          %p204 = pneg %p70
        $region38: #{tpu_custom_call.1} parent=31 // pred_check_branch
          %206 = sbr.rel (%p204) target = $region40
        $region39: #{tpu_custom_call.1} parent=31 // pred_region
          %207 = dma.done %s200, 128
        $region40: #{tpu_custom_call.1} parent=31 // pred_fallthru
          _
        %s208 = sand.u32 %s31, 1
        %s209 = scalar_lea.sflag [#allocation3], %s208
        %s210 = sand.u32 %s31, 1
        %s211 = smul.addr %s210, 8
        %s212 = scalar_lea.vmem [#allocation2], %s211
        %p213 = pneg %p44
        %p214 = pneg %p41
        %s215 = sand.u32 %s57, 1
        %s216 = scalar_lea.sflag [#allocation6], %s215
        %s217 = sand.u32 %s57, 1
        %s218 = smul.addr %s217, 8
        %s219 = scalar_lea.vmem [#allocation5], %s218
        %p220 = pneg %p70
        %p221 = pneg %p67
        %p222 = scmp.lt.s32.totalorder %s23, 1
        %s223 = scalar_select %p222, %s23, 1
        %s224 = scalar_lea.vmem %s2, %s223
        %p225 = pneg %p96
        %p226 = pneg %p93
        %p227 = pneg %p122
        %p228 = pneg %p119
        %s229 = sand.u32 %s109, 1
        %s230 = scalar_lea.sflag [#allocation4], %s229
        %s231 = sand.u32 %s109, 1
        %s232 = smul.addr %s231, 8
        %s233 = scalar_lea.vmem [#allocation7], %s232
        %p234 = scmp.lt.s32.totalorder %s23, 1
        %s235 = scalar_select %p234, %s23, 1
        %s236 = scalar_lea.vmem %s2, %s235
        %v237 = vld [vmem:[%s236] sm:$0x1]
        %v238 = vld [vmem:[%s194] sm:$0xff]
        %v239 = vld [vmem:[%s203] sm:$0xff]
        %v241 = vlaneseq
        %v242 = vshrl.u32 %v241, 7
        %v243 = vsub.s32 0, %v242
        %v244 = vrot.slane %v237, %v243
        %v246 = vmul.f32 %v244, %v238
        %v247 = vsub.f32 1.0, %v237
        %v249 = vlaneseq
        %v250 = vshrl.u32 %v249, 7
        %v251 = vsub.s32 0, %v250
        %v252 = vrot.slane %v247, %v251
        %v254 = vmul.f32 %v252, %v239
        %v255 = vadd.f32 %v246, %v254
        %256 = vst [vmem:[%s233] sm:$0xff] %v255
        %s257 = sand.u32 %s109, 1
        %s258 = scalar_lea.sflag [#allocation4], %s257
        %s259 = sand.u32 %s109, 1
        %s260 = smul.addr %s259, 8
        %s261 = scalar_lea.vmem [#allocation7], %s260
        // Predicated region
        $region41: #{tpu_custom_call.1} parent=31 // pred_check
          %p262 = pneg %p119
        $region42: #{tpu_custom_call.1} parent=31 // pred_check_branch
          %264 = sbr.rel (%p262) target = $region44
        $region43: #{tpu_custom_call.1} parent=31 // pred_region
          %s266 = ssub.s32 128, 128
          %267 = vsyncadd %s258, %s266
          %s268 = smul.addr %s23, 128
          %s269 = scalar_lea.hbm %s3, %s268
          %s271 = sshll.u32 %s261, 4
          %s272 = int_to_ptr.vmem [resolvable:$true] %s271
          %274 = dma.vmem_to_hbm [thread:$0]  %s272, 128, %s269, %s258
        $region44: #{tpu_custom_call.1} parent=31 // pred_fallthru
          _
      $region32: #{tpu_custom_call.1} parent=5 // pred_fallthru
        _
      %p275 = scmp.le.s32.totalorder 2, %s18
      // Predicated region
      $region45: #{tpu_custom_call.1} parent=5 // pred_check
        %p276 = pneg %p275
      $region46: #{tpu_custom_call.1} parent=5 // pred_check_branch
        %278 = sbr.rel (%p276) target = $region48
      $region47: #{tpu_custom_call.1} parent=5 // pred_region
        %s279 = ssub.s32 %s18, 2
        // Predicated region
        $region49: #{tpu_custom_call.1} parent=47 // pred_check
          %p280 = pneg %p125
        $region50: #{tpu_custom_call.1} parent=47 // pred_check_branch
          %282 = sbr.rel (%p280) target = $region52
        $region51: #{tpu_custom_call.1} parent=47 // pred_region
          %s283 = sand.u32 %s110, 1
          %s284 = scalar_lea.sflag [#allocation4], %s283
          %s285 = sand.u32 %s110, 1
          %s286 = smul.addr %s285, 8
          %s287 = scalar_lea.vmem [#allocation7], %s286
          %288 = dma.done %s284, 128
        $region52: #{tpu_custom_call.1} parent=47 // pred_fallthru
          _
      $region48: #{tpu_custom_call.1} parent=5 // pred_fallthru
        _
    $region6: #{tpu_custom_call.1} parent=1 // loop_footer
      %s22 = sadd.s32 1, %s18
    $region7: #{tpu_custom_call.1} parent=1 // loop_footer_branch
      %17 = sbr.rel target = $region3
    $region8: #{tpu_custom_call.1} parent=1 // loop_exit
      _
    %289 = vsyncpa [#allocation3], 1
    %s290 = scalar_lea.sflag [#allocation3], 1
    %291 = vsyncpa %s290, 1
    %292 = vsyncpa [#allocation6], 1
    %s293 = scalar_lea.sflag [#allocation6], 1
    %294 = vsyncpa %s293, 1
    %295 = vsyncpa [#allocation4], 1
    %s296 = scalar_lea.sflag [#allocation4], 1
    %297 = vsyncpa %s296, 1

</llo_original>
